<compile_context>
chip_gen: v7x
topology: tpu7x:2x2x1
jax: 0.10.0
libtpu: 0.0.40
codegen_flags: <defaults>
</compile_context>

<pallas_src>
import jax
import jax.numpy as jnp
from jax import lax
from jax.experimental import pallas as pl
from jax.experimental.pallas import tpu as pltpu


_LANE = 128
_SENTINEL = 1.0e6   # padded points sit far away from any realistic real point


def _round_up(x, m):
    return ((x + m - 1) // m) * m


def _chamfer_kernel(gts_ref, preds_ref, min1_ref, min2_ref):
    """One batch-block of the Chamfer distance.

    gts_ref:   (Bt, D, Np)  point-major ground-truth block
    preds_ref: (Bt, D, Mp)  point-major prediction block
    min1_ref:  (Bt, 1, Mp)  min over gts for each pred point  (torch.min(P, 1))
    min2_ref:  (Bt, 1, Np)  min over preds for each gt point  (torch.min(P, 2))
    """
    x = gts_ref[...]       # (Bt, D, Np), native dtype -> MXU input
    y = preds_ref[...]     # (Bt, D, Mp)

    xf = x.astype(jnp.float32)
    yf = y.astype(jnp.float32)
    xx = jnp.sum(xf * xf, axis=1)      # (Bt, Np)  sublane reduce over D
    yy = jnp.sum(yf * yf, axis=1)      # (Bt, Mp)

    # One batched MXU matmul for the whole block, contracting the shared D
    # axis directly (no transpose / relayout); -2 folded into the small RHS.
    zz = lax.dot_general(
        x, -2.0 * y,
        dimension_numbers=(((1,), (1,)), ((0,), (0,))),
        preferred_element_type=jnp.float32,
    )                                   # (Bt, Np, Mp)

    P = xx[:, :, None] + yy[:, None, :] + zz    # squared distances, f32

    min1_ref[...] = jnp.min(P, axis=1, keepdims=True)    # (Bt, 1, Mp) lane-dense
    min2_ref[...] = jnp.min(P, axis=2)[:, None, :]        # (Bt, 1, Np) lane-dense


def _per_batch_vmem_bytes(n_pad, m_pad, d, itemsize):
    """Padded VMEM bytes one batch element needs inside the kernel."""
    sub = 8 * max(1, 4 // itemsize)              # sublane pack: f32 8, bf16 16, i8 32
    d_pad = _round_up(d, sub)
    inputs = 2 * d_pad * (n_pad + m_pad) * itemsize   # double-buffered input tiles
    p_mat = _round_up(n_pad, 8) * m_pad * 4           # f32 (Np, Mp) distance matrix
    vectors = 4 * 8 * (n_pad + m_pad) * 4             # xx/yy/mins + double-buffered outputs
    return inputs + p_mat + vectors


def _pick_block_batches(B, per_batch_bytes, budget_bytes):
    """Largest divisor of B that fits the VMEM budget and keeps grid >= 2."""
    cap = max(1, budget_bytes // max(per_batch_bytes, 1))
    if B >= 2:
        cap = min(cap, B // 2)     # guarantee >= 2 grid steps (v7x megacore)
    cap = max(1, min(cap, B))
    for bt in range(cap, 0, -1):
        if B % bt == 0:
            return bt
    return 1


def chamfer_loss(preds, gts, *, vmem_budget_bytes=20 << 20):
    """preds: (B, M, D), gts: (B, N, D). Returns the scalar Chamfer loss."""
    B, M, D = preds.shape
    Bg, N, Dg = gts.shape
    assert B == Bg and D == Dg, (preds.shape, gts.shape)

    # Pad point counts to lane multiples with a far-away sentinel so every
    # kernel load/store is lane-dense; sentinel points never win a min and the
    # padded lanes are discarded below.
    Mp = _round_up(M, _LANE)
    Np = _round_up(N, _LANE)
    preds_p = preds if Mp == M else jnp.pad(
        preds, ((0, 0), (0, Mp - M), (0, 0)), constant_values=_SENTINEL)
    gts_p = gts if Np == N else jnp.pad(
        gts, ((0, 0), (0, Np - N), (0, 0)), constant_values=_SENTINEL)

    # Point-major layout: points on lanes, D on sublanes.
    gts_t = jnp.transpose(gts_p, (0, 2, 1))      # (B, D, Np)
    preds_t = jnp.transpose(preds_p, (0, 2, 1))  # (B, D, Mp)

    itemsize = jnp.dtype(preds.dtype).itemsize
    per_batch = _per_batch_vmem_bytes(Np, Mp, D, itemsize)
    Bt = _pick_block_batches(B, per_batch, vmem_budget_bytes)
    vmem_limit = int(min(max(Bt * per_batch + (4 << 20), 28 << 20), 60 << 20))

    # TODO(synk): for production point counts (N, M in the thousands) add N/M
    # tiling (256-aligned) with running-min VMEM scratch so the f32 (Np, Mp)
    # matrix never exceeds a single tile.

    min1, min2 = pl.pallas_call(
        _chamfer_kernel,
        out_shape=(
            jax.ShapeDtypeStruct((B, 1, Mp), jnp.float32),
            jax.ShapeDtypeStruct((B, 1, Np), jnp.float32),
        ),
        grid=(B // Bt,),
        in_specs=[
            pl.BlockSpec((Bt, D, Np), lambda b: (b, 0, 0)),   # gts, point-major
            pl.BlockSpec((Bt, D, Mp), lambda b: (b, 0, 0)),   # preds, point-major
        ],
        out_specs=(
            pl.BlockSpec((Bt, 1, Mp), lambda b: (b, 0, 0)),
            pl.BlockSpec((Bt, 1, Np), lambda b: (b, 0, 0)),
        ),
        compiler_params=pltpu.CompilerParams(
            dimension_semantics=("parallel",),   # no cross-step accumulator
            vmem_limit_bytes=vmem_limit,
        ),
    )(gts_t, preds_t)

    loss_1 = jnp.mean(min1[:, 0, :M])   # torch.mean(torch.min(P, 1)) over (B, M)
    loss_2 = jnp.mean(min2[:, 0, :N])   # torch.mean(torch.min(P, 2)) over (B, N)
    return loss_1 + loss_2


def chamfer_loss_ref(preds, gts):
    """Pure-JAX reference mirroring the PyTorch module."""
    xx = jnp.sum(gts ** 2, axis=-1)                       # (B, N)
    yy = jnp.sum(preds ** 2, axis=-1)                     # (B, M)
    zz = jnp.einsum("bnd,bmd->bnm", gts, preds)           # (B, N, M)
    P = xx[:, :, None] + yy[:, None, :] - 2.0 * zz
    return jnp.mean(jnp.min(P, axis=1)) + jnp.mean(jnp.min(P, axis=2))


if __name__ == "__main__":
    B, M, N, D = 2, 48, 64, 16   # preds: (B, M, D), gts: (B, N, D)
    key = jax.random.PRNGKey(0)
    kp, kg = jax.random.split(key)
    preds = jax.random.normal(kp, (B, M, D), dtype=jnp.float32)
    gts = jax.random.normal(kg, (B, N, D), dtype=jnp.float32)

    loss = jax.block_until_ready(chamfer_loss(preds, gts))
    ref = jax.block_until_ready(chamfer_loss_ref(preds, gts))

    assert jnp.allclose(loss, ref, atol=1e-4, rtol=1e-4), (loss, ref)
    print("KERNEL_OK")
</pallas_src>

<mosaic_0001>
module attributes {stable_mosaic.version = 11 : i64} {
  func.func @_chamfer_kernel(%arg0: i32, %arg1: memref<1x16x128xf32, #tpu.memory_space<vmem>>, %arg2: memref<1x16x128xf32, #tpu.memory_space<vmem>>, %arg3: memref<1x1x128xf32, #tpu.memory_space<vmem>>, %arg4: memref<1x1x128xf32, #tpu.memory_space<vmem>>) attributes {dimension_semantics = [#tpu.dimension_semantics<parallel>], iteration_bounds = array<i64: 2>, scalar_prefetch = 0 : i64, scratch_operands = 0 : i64, tpu.core_type = #tpu.core_type<tc>, window_params = [{transform_indices = @transform_0, window_bounds = array<i64: 1, 16, 128>}, {transform_indices = @transform_1, window_bounds = array<i64: 1, 16, 128>}, {transform_indices = @transform_2, window_bounds = array<i64: 1, 1, 128>}, {transform_indices = @transform_3, window_bounds = array<i64: 1, 1, 128>}]} {
    %c0 = arith.constant 0 : index
    %c0_0 = arith.constant 0 : index
    %c0_1 = arith.constant 0 : index
    %0 = vector.load %arg1[%c0, %c0_0, %c0_1] : memref<1x16x128xf32, #tpu.memory_space<vmem>>, vector<1x16x128xf32>
    %c0_2 = arith.constant 0 : index
    %c0_3 = arith.constant 0 : index
    %c0_4 = arith.constant 0 : index
    %1 = vector.load %arg2[%c0_2, %c0_3, %c0_4] : memref<1x16x128xf32, #tpu.memory_space<vmem>>, vector<1x16x128xf32>
    %2 = arith.mulf %0, %0 : vector<1x16x128xf32>
    %cst = arith.constant dense<0.000000e+00> : vector<1x128xf32>
    %3 = vector.multi_reduction <add>, %2, %cst [1] : vector<1x16x128xf32> to vector<1x128xf32>
    %4 = arith.mulf %1, %1 : vector<1x16x128xf32>
    %cst_5 = arith.constant dense<0.000000e+00> : vector<1x128xf32>
    %5 = vector.multi_reduction <add>, %4, %cst_5 [1] : vector<1x16x128xf32> to vector<1x128xf32>
    %cst_6 = arith.constant -2.000000e+00 : f32
    %6 = vector.broadcast %cst_6 : f32 to vector<1x16x128xf32>
    %7 = arith.mulf %6, %1 : vector<1x16x128xf32>
    %cst_7 = arith.constant dense<0.000000e+00> : vector<1x128x128xf32>
    %8 = tpu.matmul %0, %7, %cst_7 {dimension_numbers = #tpu.dot_dimension_numbers<[1], [1], [2], [2], [0, 0, 0, 2, 1, 2], [0], [0]>} : vector<1x16x128xf32>, vector<1x16x128xf32>, vector<1x128x128xf32> -> vector<1x128x128xf32>
    %9 = vector.shape_cast %3 : vector<1x128xf32> to vector<1x128x1xf32>
    %10 = vector.shape_cast %5 : vector<1x128xf32> to vector<1x1x128xf32>
    %11 = vector.broadcast %9 : vector<1x128x1xf32> to vector<1x128x128xf32>
    %12 = vector.broadcast %10 : vector<1x1x128xf32> to vector<1x128x128xf32>
    %13 = arith.addf %11, %12 : vector<1x128x128xf32>
    %14 = arith.addf %13, %8 : vector<1x128x128xf32>
    %cst_8 = arith.constant dense<0x7F800000> : vector<1x128xf32>
    %15 = vector.multi_reduction <minimumf>, %14, %cst_8 [1] : vector<1x128x128xf32> to vector<1x128xf32>
    %16 = vector.shape_cast %15 : vector<1x128xf32> to vector<1x1x128xf32>
    %c0_9 = arith.constant 0 : index
    %c0_10 = arith.constant 0 : index
    %c0_11 = arith.constant 0 : index
    %17 = vector.load %arg3[%c0_9, %c0_10, %c0_11] : memref<1x1x128xf32, #tpu.memory_space<vmem>>, vector<1x1x128xf32>
    tpu.vector_store %arg3[%c0_9, %c0_10, %c0_11], %16 {strides = array<i32>} : memref<1x1x128xf32, #tpu.memory_space<vmem>>, vector<1x1x128xf32>,
    %cst_12 = arith.constant dense<0x7F800000> : vector<1x128xf32>
    %18 = vector.multi_reduction <minimumf>, %14, %cst_12 [2] : vector<1x128x128xf32> to vector<1x128xf32>
    %19 = vector.shape_cast %18 : vector<1x128xf32> to vector<1x1x128xf32>
    %c0_13 = arith.constant 0 : index
    %c0_14 = arith.constant 0 : index
    %c0_15 = arith.constant 0 : index
    %20 = vector.load %arg4[%c0_13, %c0_14, %c0_15] : memref<1x1x128xf32, #tpu.memory_space<vmem>>, vector<1x1x128xf32>
    tpu.vector_store %arg4[%c0_13, %c0_14, %c0_15], %19 {strides = array<i32>} : memref<1x1x128xf32, #tpu.memory_space<vmem>>, vector<1x1x128xf32>,
    return
  }
  func.func @transform_0(%arg0: i32) -> (i32, i32, i32) {
    %c0_i32 = arith.constant 0 : i32
    %c0_i32_0 = arith.constant 0 : i32
    %c0_i32_1 = arith.constant 0 : i32
    return %arg0, %c0_i32, %c0_i32_0 : i32, i32, i32
  }
  func.func @transform_1(%arg0: i32) -> (i32, i32, i32) {
    %c0_i32 = arith.constant 0 : i32
    %c0_i32_0 = arith.constant 0 : i32
    %c0_i32_1 = arith.constant 0 : i32
    return %arg0, %c0_i32, %c0_i32_0 : i32, i32, i32
  }
  func.func @transform_2(%arg0: i32) -> (i32, i32, i32) {
    %c0_i32 = arith.constant 0 : i32
    %c0_i32_0 = arith.constant 0 : i32
    %c0_i32_1 = arith.constant 0 : i32
    return %arg0, %c0_i32, %c0_i32_0 : i32, i32, i32
  }
  func.func @transform_3(%arg0: i32) -> (i32, i32, i32) {
    %c0_i32 = arith.constant 0 : i32
    %c0_i32_0 = arith.constant 0 : i32
    %c0_i32_1 = arith.constant 0 : i32
    return %arg0, %c0_i32, %c0_i32_0 : i32, i32, i32
  }
}

</mosaic_0001>

<llo_original>
// kernel: tpu_custom_call.1
$region0: #{tpu_custom_call.1}
  #allocation0 [shape = 'u32[]', space=smem, size = 0x4, offset = 0x4, fixed_abs, tag = 'smem constant byte address 0x4 - core index']
  #allocation1 [shape = 'u32[144,128]{1,0:T(1,128)}', space=vmem, size = 0x12000, scoped, tag = 'internal scratch']
  %s0 = inlined_call_operand.hbm [shape: f32[2,16,128], index: 0, kind: input, shape index: {}]
  %s1 = inlined_call_operand.hbm [shape: f32[2,16,128], index: 1, kind: input, shape index: {}]
  %s2 = inlined_call_operand.hbm [shape: f32[2,1,128], index: 2, kind: output, shape index: {0}]
  %s3 = inlined_call_operand.hbm [shape: f32[2,1,128], index: 3, kind: output, shape index: {1}]
  %4 = xla_tuple %s2, %s3
  %s5 = sld [smem:[#allocation0]]
  $region57: #{tpu_custom_call.1} parent=0
    _
  %s7 = ssub.s32 1, %s5
  %s8 = scalar_select 0, %s7, %s5
  $region1: #{tpu_custom_call.1} parent=0
    #allocation2 [shape = 'u8[16384]{0}', space=vmem, size = 0x4000, scoped, tag = 'input window, operand 0']
    #allocation3 [shape = 's32[2]{0}', space=sflag, size = 0x8, scoped, tag = 'scoped memory for tpu_custom_call.1']
    #allocation4 [shape = 's32[2]{0}', space=sflag, size = 0x8, scoped, tag = 'scoped memory for tpu_custom_call.1']
    #allocation5 [shape = 'u8[16384]{0}', space=vmem, size = 0x4000, scoped, tag = 'input window, operand 1']
    #allocation6 [shape = 's32[2]{0}', space=sflag, size = 0x8, scoped, tag = 'scoped memory for tpu_custom_call.1']
    #allocation7 [shape = 'u8[1024]{0}', space=vmem, size = 0x400, scoped, tag = 'output window, operand 0']
    #allocation8 [shape = 'u8[1024]{0}', space=vmem, size = 0x400, scoped, tag = 'output window, operand 1']
    #allocation9 [shape = 's32[2]{0}', space=sflag, size = 0x8, scoped, tag = 'scoped memory for tpu_custom_call.1']
    %9 = vsyncpa [#allocation3], 0
    %s10 = scalar_lea.sflag [#allocation3], 1
    %11 = vsyncpa %s10, 0
    %12 = vsyncpa [#allocation6], 0
    %s13 = scalar_lea.sflag [#allocation6], 1
    %14 = vsyncpa %s13, 0
    %15 = vsyncpa [#allocation4], 0
    %s16 = scalar_lea.sflag [#allocation4], 1
    %17 = vsyncpa %s16, 0
    %18 = vsyncpa [#allocation9], 0
    %s19 = scalar_lea.sflag [#allocation9], 1
    %20 = vsyncpa %s19, 0
    loop: start=0, step=1, limit=4
    $region2: #{tpu_custom_call.1} parent=1 // loop_pre_header
      _
    $region3: #{tpu_custom_call.1} parent=1 // loop_header
      %s22 = sphi 0, %s26
      %p23 = scmp.ge.s32.totalorder %s22, 4
      %s32 = sphi 0, %s34
      %s35 = sphi 0, %s32
      %s36 = sphi 0, %s35
      %s52 = sphi 0, %s36
      %s58 = sphi 0, %s60
      %s61 = sphi 0, %s58
      %s62 = sphi 0, %s61
      %s78 = sphi 0, %s62
      %s84 = sphi 0, %s86
      %s87 = sphi 0, %s84
      %s88 = sphi 0, %s87
      %s104 = sphi 0, %s88
      %s110 = sphi 0, %s112
      %s113 = sphi 0, %s110
      %s114 = sphi 0, %s113
      %s130 = sphi 0, %s114
    $region4: #{tpu_custom_call.1} parent=1 // loop_header_branch
      %25 = sbr.rel (%p23) target = $region8
    $region5: #{tpu_custom_call.1} parent=1 // loop_body
      %s27 = ssub.s32 %s22, 1
      %s28 = ssub.s32 %s22, 2
      %s29 = sadd.s32 %s22, 1
      %s30 = ssub.s32 %s22, %s29
      %p31 = scmp.eq.s32.totalorder %s30, 0
      %s33 = sadd.s32 %s32, 1
      %s34 = scalar_select %p31, %s32, %s33
      %p37 = pneg %p31
      %p38 = scmp.eq.s32.totalorder %s22, 1
      %p39 = por %p37, %p38
      %p40 = scmp.ne.s32.totalorder %s32, %s35
      %p41 = scmp.eq.s32.totalorder %s22, 0
      %p42 = por %p40, %p41
      %p43 = scmp.ne.s32.totalorder %s32, %s35
      %p44 = scmp.eq.s32.totalorder %s27, 1
      %p45 = por %p43, %p44
      %p46 = scmp.ne.s32.totalorder %s35, %s36
      %p47 = scmp.eq.s32.totalorder %s27, 0
      %p48 = por %p46, %p47
      %p49 = scmp.ne.s32.totalorder %s35, %s36
      %p50 = scmp.eq.s32.totalorder %s28, 1
      %p51 = por %p49, %p50
      %p53 = scmp.ne.s32.totalorder %s36, %s52
      %p54 = scmp.eq.s32.totalorder %s28, 0
      %p55 = por %p53, %p54
      %s56 = ssub.s32 %s22, %s29
      %p57 = scmp.eq.s32.totalorder %s56, 0
      %s59 = sadd.s32 %s58, 1
      %s60 = scalar_select %p57, %s58, %s59
      %p63 = pneg %p57
      %p64 = scmp.eq.s32.totalorder %s22, 1
      %p65 = por %p63, %p64
      %p66 = scmp.ne.s32.totalorder %s58, %s61
      %p67 = scmp.eq.s32.totalorder %s22, 0
      %p68 = por %p66, %p67
      %p69 = scmp.ne.s32.totalorder %s58, %s61
      %p70 = scmp.eq.s32.totalorder %s27, 1
      %p71 = por %p69, %p70
      %p72 = scmp.ne.s32.totalorder %s61, %s62
      %p73 = scmp.eq.s32.totalorder %s27, 0
      %p74 = por %p72, %p73
      %p75 = scmp.ne.s32.totalorder %s61, %s62
      %p76 = scmp.eq.s32.totalorder %s28, 1
      %p77 = por %p75, %p76
      %p79 = scmp.ne.s32.totalorder %s62, %s78
      %p80 = scmp.eq.s32.totalorder %s28, 0
      %p81 = por %p79, %p80
      %s82 = ssub.s32 %s22, %s29
      %p83 = scmp.eq.s32.totalorder %s82, 0
      %s85 = sadd.s32 %s84, 1
      %s86 = scalar_select %p83, %s84, %s85
      %p89 = pneg %p83
      %p90 = scmp.eq.s32.totalorder %s22, 1
      %p91 = por %p89, %p90
      %p92 = scmp.ne.s32.totalorder %s84, %s87
      %p93 = scmp.eq.s32.totalorder %s22, 0
      %p94 = por %p92, %p93
      %p95 = scmp.ne.s32.totalorder %s84, %s87
      %p96 = scmp.eq.s32.totalorder %s27, 1
      %p97 = por %p95, %p96
      %p98 = scmp.ne.s32.totalorder %s87, %s88
      %p99 = scmp.eq.s32.totalorder %s27, 0
      %p100 = por %p98, %p99
      %p101 = scmp.ne.s32.totalorder %s87, %s88
      %p102 = scmp.eq.s32.totalorder %s28, 1
      %p103 = por %p101, %p102
      %p105 = scmp.ne.s32.totalorder %s88, %s104
      %p106 = scmp.eq.s32.totalorder %s28, 0
      %p107 = por %p105, %p106
      %s108 = ssub.s32 %s22, %s29
      %p109 = scmp.eq.s32.totalorder %s108, 0
      %s111 = sadd.s32 %s110, 1
      %s112 = scalar_select %p109, %s110, %s111
      %p115 = pneg %p109
      %p116 = scmp.eq.s32.totalorder %s22, 1
      %p117 = por %p115, %p116
      %p118 = scmp.ne.s32.totalorder %s110, %s113
      %p119 = scmp.eq.s32.totalorder %s22, 0
      %p120 = por %p118, %p119
      %p121 = scmp.ne.s32.totalorder %s110, %s113
      %p122 = scmp.eq.s32.totalorder %s27, 1
      %p123 = por %p121, %p122
      %p124 = scmp.ne.s32.totalorder %s113, %s114
      %p125 = scmp.eq.s32.totalorder %s27, 0
      %p126 = por %p124, %p125
      %p127 = scmp.ne.s32.totalorder %s113, %s114
      %p128 = scmp.eq.s32.totalorder %s28, 1
      %p129 = por %p127, %p128
      %p131 = scmp.ne.s32.totalorder %s114, %s130
      %p132 = scmp.eq.s32.totalorder %s28, 0
      %p133 = por %p131, %p132
      %p134 = scmp.le.s32.totalorder 1, %s22
      %p135 = scmp.lt.s32.totalorder %s22, 3
      %p136 = pnand %p134, %p135
      %p137 = pneg %p136
      // Predicated region
      $region9: #{tpu_custom_call.1} parent=5 // pred_check
        _
      $region10: #{tpu_custom_call.1} parent=5 // pred_check_branch
        %139 = sbr.rel (%p136) target = $region12
      $region11: #{tpu_custom_call.1} parent=5 // pred_region
        %s140 = ssub.s32 %s22, 1
      $region12: #{tpu_custom_call.1} parent=5 // pred_fallthru
        _
      %p141 = scmp.lt.s32.totalorder %s22, 2
      // Predicated region
      $region13: #{tpu_custom_call.1} parent=5 // pred_check
        %p142 = pneg %p141
      $region14: #{tpu_custom_call.1} parent=5 // pred_check_branch
        %144 = sbr.rel (%p142) target = $region16
      $region15: #{tpu_custom_call.1} parent=5 // pred_region
        // Predicated region
        $region17: #{tpu_custom_call.1} parent=15 // pred_check
          %p145 = pneg %p42
        $region18: #{tpu_custom_call.1} parent=15 // pred_check_branch
          %147 = sbr.rel (%p145) target = $region20
        $region19: #{tpu_custom_call.1} parent=15 // pred_region
          %s148 = sand.u32 %s32, 1
          %s149 = scalar_lea.sflag [#allocation3], %s148
          %s150 = sand.u32 %s32, 1
          %s151 = smul.addr %s150, 16
          %s152 = scalar_lea.vmem [#allocation2], %s151
          %s154 = ssub.s32 256, 256
          %155 = vsyncadd %s149, %s154
          %s156 = smul.addr %s22, 2
          %s157 = smul.addr %s156, 128
          %s158 = scalar_lea.hbm %s0, %s157
          %s159 = sshll.u32 %s152, 4
          %s160 = int_to_ptr.vmem [resolvable:$true] %s159
          %165 = dma.hbm_to_vmem [thread:$0]  %s158, 256, %s160, %s149, 128, 128, 8
        $region20: #{tpu_custom_call.1} parent=15 // pred_fallthru
          _
        // Predicated region
        $region21: #{tpu_custom_call.1} parent=15 // pred_check
          %p166 = pneg %p68
        $region22: #{tpu_custom_call.1} parent=15 // pred_check_branch
          %168 = sbr.rel (%p166) target = $region24
        $region23: #{tpu_custom_call.1} parent=15 // pred_region
          %s169 = sand.u32 %s58, 1
          %s170 = scalar_lea.sflag [#allocation6], %s169
          %s171 = sand.u32 %s58, 1
          %s172 = smul.addr %s171, 16
          %s173 = scalar_lea.vmem [#allocation5], %s172
          %s175 = ssub.s32 256, 256
          %176 = vsyncadd %s170, %s175
          %s177 = smul.addr %s22, 2
          %s178 = smul.addr %s177, 128
          %s179 = scalar_lea.hbm %s1, %s178
          %s180 = sshll.u32 %s173, 4
          %s181 = int_to_ptr.vmem [resolvable:$true] %s180
          %186 = dma.hbm_to_vmem [thread:$0]  %s179, 256, %s181, %s170, 128, 128, 8
        $region24: #{tpu_custom_call.1} parent=15 // pred_fallthru
          _
      $region16: #{tpu_custom_call.1} parent=5 // pred_fallthru
        _
      %p187 = scmp.le.s32.totalorder 1, %s22
      %p188 = scmp.lt.s32.totalorder %s22, 3
      %p189 = pnand %p187, %p188
      %p190 = pneg %p189
      // Predicated region
      $region25: #{tpu_custom_call.1} parent=5 // pred_check
        _
      $region26: #{tpu_custom_call.1} parent=5 // pred_check_branch
        %192 = sbr.rel (%p189) target = $region28
      $region27: #{tpu_custom_call.1} parent=5 // pred_region
        %s193 = ssub.s32 %s22, 1
        %s194 = sand.u32 %s35, 1
        %s195 = scalar_lea.sflag [#allocation3], %s194
        %s196 = sand.u32 %s35, 1
        %s197 = smul.addr %s196, 16
        %s198 = scalar_lea.vmem [#allocation2], %s197
        // Predicated region
        $region29: #{tpu_custom_call.1} parent=27 // pred_check
          %p199 = pneg %p48
        $region30: #{tpu_custom_call.1} parent=27 // pred_check_branch
          %201 = sbr.rel (%p199) target = $region32
        $region31: #{tpu_custom_call.1} parent=27 // pred_region
          %202 = dma.done %s195, 256
        $region32: #{tpu_custom_call.1} parent=27 // pred_fallthru
          _
        %s203 = sand.u32 %s61, 1
        %s204 = scalar_lea.sflag [#allocation6], %s203
        %s205 = sand.u32 %s61, 1
        %s206 = smul.addr %s205, 16
        %s207 = scalar_lea.vmem [#allocation5], %s206
        // Predicated region
        $region33: #{tpu_custom_call.1} parent=27 // pred_check
          %p208 = pneg %p74
        $region34: #{tpu_custom_call.1} parent=27 // pred_check_branch
          %210 = sbr.rel (%p208) target = $region36
        $region35: #{tpu_custom_call.1} parent=27 // pred_region
          %211 = dma.done %s204, 256
        $region36: #{tpu_custom_call.1} parent=27 // pred_fallthru
          _
        %s212 = sand.u32 %s35, 1
        %s213 = scalar_lea.sflag [#allocation3], %s212
        %s214 = sand.u32 %s35, 1
        %s215 = smul.addr %s214, 16
        %s216 = scalar_lea.vmem [#allocation2], %s215
        %p217 = pneg %p48
        %p218 = pneg %p45
        %s219 = sand.u32 %s61, 1
        %s220 = scalar_lea.sflag [#allocation6], %s219
        %s221 = sand.u32 %s61, 1
        %s222 = smul.addr %s221, 16
        %s223 = scalar_lea.vmem [#allocation5], %s222
        %p224 = pneg %p74
        %p225 = pneg %p71
        %p226 = pneg %p100
        %p227 = pneg %p97
        %s228 = sand.u32 %s87, 1
        %s229 = scalar_lea.sflag [#allocation4], %s228
        %s230 = sand.u32 %s87, 1
        %s231 = scalar_lea.vmem [#allocation7], %s230
        %p232 = pneg %p126
        %p233 = pneg %p123
        %s234 = sand.u32 %s113, 1
        %s235 = scalar_lea.sflag [#allocation9], %s234
        %s236 = sand.u32 %s113, 1
        %s237 = scalar_lea.vmem [#allocation8], %s236
        %v238 = vld [vmem:[%s198] sm:$0xff]
        %v239 = vld [vmem:[%s198 + $0x8] sm:$0xff]
        %v240 = vld [vmem:[%s207] sm:$0xff]
        %v241 = vld [vmem:[%s207 + $0x8] sm:$0xff]
        %v242 = vmul.f32 %v238, %v238
        %v243 = vmul.f32 %v239, %v239
        %v244 = vadd.f32 %v242, %v243
        %v245 = vrot.slane %v244, 4
        %v246 = vadd.f32 %v244, %v245
        %v247 = vrot.slane %v246, 2
        %v248 = vadd.f32 %v246, %v247
        %v249 = vrot.slane %v248, 1
        %v250 = vadd.f32 %v248, %v249
        %v251 = vmul.f32 %v240, %v240
        %v252 = vmul.f32 %v241, %v241
        %v253 = vadd.f32 %v251, %v252
        %v254 = vrot.slane %v253, 4
        %v255 = vadd.f32 %v253, %v254
        %v256 = vrot.slane %v255, 2
        %v257 = vadd.f32 %v255, %v256
        %v258 = vrot.slane %v257, 1
        %v259 = vadd.f32 %v257, %v258
        %v260 = vmul.f32 %v240, -2.0
        %v261 = vmul.f32 %v241, -2.0
        %262 = vxpose.xlu0.b32.start [1/16] %v238, 128
        %263 = vxpose.xlu0.b32.cont [2/16] %v239, 128
        %264 = vxpose.xlu0.b32.cont [3/16] 0.0, 128
        %265 = vxpose.xlu0.b32.cont [4/16] 0.0, 128
        %266 = vxpose.xlu0.b32.cont [5/16] 0.0, 128
        %267 = vxpose.xlu0.b32.cont [6/16] 0.0, 128
        %268 = vxpose.xlu0.b32.cont [7/16] 0.0, 128
        %269 = vxpose.xlu0.b32.cont [8/16] 0.0, 128
        %270 = vxpose.xlu0.b32.cont [9/16] 0.0, 128
        %271 = vxpose.xlu0.b32.cont [10/16] 0.0, 128
        %272 = vxpose.xlu0.b32.cont [11/16] 0.0, 128
        %273 = vxpose.xlu0.b32.cont [12/16] 0.0, 128
        %274 = vxpose.xlu0.b32.cont [13/16] 0.0, 128
        %275 = vxpose.xlu0.b32.cont [14/16] 0.0, 128
        %276 = vxpose.xlu0.b32.cont [15/16] 0.0, 128
        %277 = vxpose.xlu0.b32.end [16/16] 0.0, 128
        %v278 = vpop.trf.xlu0
        %v279 = vpop.trf.xlu0
        %v280 = vpop.trf.xlu0
        %v281 = vpop.trf.xlu0
        %v282 = vpop.trf.xlu0
        %v283 = vpop.trf.xlu0
        %v284 = vpop.trf.xlu0
        %v285 = vpop.trf.xlu0
        %v286 = vpop.trf.xlu0
        %v287 = vpop.trf.xlu0
        %v288 = vpop.trf.xlu0
        %v289 = vpop.trf.xlu0
        %v290 = vpop.trf.xlu0
        %v291 = vpop.trf.xlu0
        %v292 = vpop.trf.xlu0
        %v293 = vpop.trf.xlu0
        %vm294 = vcmask 130048
        %v296 = vsel %vm294, %v278, 0
        %v299 = vsel %vm294, %v279, 0
        %v302 = vsel %vm294, %v280, 0
        %v305 = vsel %vm294, %v281, 0
        %v308 = vsel %vm294, %v282, 0
        %v311 = vsel %vm294, %v283, 0
        %v314 = vsel %vm294, %v284, 0
        %v317 = vsel %vm294, %v285, 0
        %v320 = vsel %vm294, %v286, 0
        %v323 = vsel %vm294, %v287, 0
        %v326 = vsel %vm294, %v288, 0
        %v329 = vsel %vm294, %v289, 0
        %v332 = vsel %vm294, %v290, 0
        %v335 = vsel %vm294, %v291, 0
        %v338 = vsel %vm294, %v292, 0
        %v341 = vsel %vm294, %v293, 0
        %343 = vmatprep.subr.mxu0 0.0
        %344 = vmatpush1.msra.mxu0 %v260
        %345 = vmatprep.subr.mxu0 0.0
        %346 = vmatpush1.msra.mxu0 %v261
        %347 = vmatprep.subr.mxu0 0.0
        %348 = vmatpush1.msra.mxu0 0.0
        %349 = vmatprep.subr.mxu0 0.0
        %350 = vmatpush1.msra.mxu0 0.0
        %351 = vmatprep.subr.mxu0 0.0
        %352 = vmatpush1.msra.mxu0 0.0
        %353 = vmatprep.subr.mxu0 0.0
        %354 = vmatpush1.msra.mxu0 0.0
        %355 = vmatprep.subr.mxu0 0.0
        %356 = vmatpush1.msra.mxu0 0.0
        %357 = vmatprep.subr.mxu0 0.0
        %358 = vmatpush1.msra.mxu0 0.0
        %359 = vmatprep.subr.mxu0 0.0
        %360 = vmatpush1.msra.mxu0 0.0
        %361 = vmatprep.subr.mxu0 0.0
        %362 = vmatpush1.msra.mxu0 0.0
        %363 = vmatprep.subr.mxu0 0.0
        %364 = vmatpush1.msra.mxu0 0.0
        %365 = vmatprep.subr.mxu0 0.0
        %366 = vmatpush1.msra.mxu0 0.0
        %367 = vmatprep.subr.mxu0 0.0
        %368 = vmatpush1.msra.mxu0 0.0
        %369 = vmatprep.subr.mxu0 0.0
        %370 = vmatpush1.msra.mxu0 0.0
        %371 = vmatprep.subr.mxu0 0.0
        %372 = vmatpush1.msra.mxu0 0.0
        %373 = vmatprep.subr.mxu0 0.0
        %374 = vmatpush1.msra.mxu0 0.0
        %375 = vmatprep.subr.mxu0 0.0
        %376 = vmatpush1.msra.mxu0 0.0
        %377 = vmatprep.subr.mxu0 0.0
        %378 = vmatpush1.msra.mxu0 0.0
        %379 = vmatprep.subr.mxu0 0.0
        %380 = vmatpush1.msra.mxu0 0.0
        %381 = vmatprep.subr.mxu0 0.0
        %382 = vmatpush1.msra.mxu0 0.0
        %383 = vmatprep.subr.mxu0 0.0
        %384 = vmatpush1.msra.mxu0 0.0
        %385 = vmatprep.subr.mxu0 0.0
        %386 = vmatpush1.msra.mxu0 0.0
        %387 = vmatprep.subr.mxu0 0.0
        %388 = vmatpush1.msra.mxu0 0.0
        %389 = vmatprep.subr.mxu0 0.0
        %390 = vmatpush1.msra.mxu0 0.0
        %391 = vmatprep.subr.mxu0 0.0
        %392 = vmatpush1.msra.mxu0 0.0
        %393 = vmatprep.subr.mxu0 0.0
        %394 = vmatpush1.msra.mxu0 0.0
        %395 = vmatprep.subr.mxu0 0.0
        %396 = vmatpush1.msra.mxu0 0.0
        %397 = vmatprep.subr.mxu0 0.0
        %398 = vmatpush1.msra.mxu0 0.0
        %399 = vmatprep.subr.mxu0 0.0
        %400 = vmatpush1.msra.mxu0 0.0
        %401 = vmatprep.subr.mxu0 0.0
        %402 = vmatpush1.msra.mxu0 0.0
        %403 = vmatprep.subr.mxu0 0.0
        %404 = vmatpush1.msra.mxu0 0.0
        %405 = vmatprep.subr.mxu0 0.0
        %406 = vmatpush1.msra.mxu0 0.0
        %407 = vmatprep.mubr.f32.mxu0 0.0
        %408 = vmatmul.mubr.f32.gmra.mrb[0].mxu0 %v296
        %v409 = vpop.f32.mrb[0].mxu0
        %v410 = vadd.f32 0.0, %v409
        %v411 = vpop.f32.mrb[0].mxu0
        %412 = vmatprep.mubr.f32.mxu0 0.0
        %413 = vmatmul.mubr.f32.gmra.mrb[0].mxu0 %v299
        %v414 = vpop.f32.mrb[0].mxu0
        %v415 = vadd.f32 0.0, %v414
        %v416 = vpop.f32.mrb[0].mxu0
        %417 = vmatprep.mubr.f32.mxu0 0.0
        %418 = vmatmul.mubr.f32.gmra.mrb[0].mxu0 %v302
        %v419 = vpop.f32.mrb[0].mxu0
        %v420 = vadd.f32 0.0, %v419
        %v421 = vpop.f32.mrb[0].mxu0
        %422 = vmatprep.mubr.f32.mxu0 0.0
        %423 = vmatmul.mubr.f32.gmra.mrb[0].mxu0 %v305
        %v424 = vpop.f32.mrb[0].mxu0
        %v425 = vadd.f32 0.0, %v424
        %v426 = vpop.f32.mrb[0].mxu0
        %427 = vmatprep.mubr.f32.mxu0 0.0
        %428 = vmatmul.mubr.f32.gmra.mrb[0].mxu0 %v308
        %v429 = vpop.f32.mrb[0].mxu0
        %v430 = vadd.f32 0.0, %v429
        %v431 = vpop.f32.mrb[0].mxu0
        %432 = vmatprep.mubr.f32.mxu0 0.0
        %433 = vmatmul.mubr.f32.gmra.mrb[0].mxu0 %v311
        %v434 = vpop.f32.mrb[0].mxu0
        %v435 = vadd.f32 0.0, %v434
        %v436 = vpop.f32.mrb[0].mxu0
        %437 = vmatprep.mubr.f32.mxu0 0.0
        %438 = vmatmul.mubr.f32.gmra.mrb[0].mxu0 %v314
        %v439 = vpop.f32.mrb[0].mxu0
        %v440 = vadd.f32 0.0, %v439
        %v441 = vpop.f32.mrb[0].mxu0
        %442 = vmatprep.mubr.f32.mxu0 0.0
        %443 = vmatmul.mubr.f32.gmra.mrb[0].mxu0 %v317
        %v444 = vpop.f32.mrb[0].mxu0
        %v445 = vadd.f32 0.0, %v444
        %v446 = vpop.f32.mrb[0].mxu0
        %447 = vmatprep.mubr.f32.mxu0 0.0
        %448 = vmatmul.mubr.f32.gmra.mrb[0].mxu0 %v320
        %v449 = vpop.f32.mrb[0].mxu0
        %v450 = vadd.f32 0.0, %v449
        %v451 = vpop.f32.mrb[0].mxu0
        %452 = vmatprep.mubr.f32.mxu0 0.0
        %453 = vmatmul.mubr.f32.gmra.mrb[0].mxu0 %v323
        %v454 = vpop.f32.mrb[0].mxu0
        %v455 = vadd.f32 0.0, %v454
        %v456 = vpop.f32.mrb[0].mxu0
        %457 = vmatprep.mubr.f32.mxu0 0.0
        %458 = vmatmul.mubr.f32.gmra.mrb[0].mxu0 %v326
        %v459 = vpop.f32.mrb[0].mxu0
        %v460 = vadd.f32 0.0, %v459
        %v461 = vpop.f32.mrb[0].mxu0
        %462 = vmatprep.mubr.f32.mxu0 0.0
        %463 = vmatmul.mubr.f32.gmra.mrb[0].mxu0 %v329
        %v464 = vpop.f32.mrb[0].mxu0
        %v465 = vadd.f32 0.0, %v464
        %v466 = vpop.f32.mrb[0].mxu0
        %467 = vmatprep.mubr.f32.mxu0 0.0
        %468 = vmatmul.mubr.f32.gmra.mrb[0].mxu0 %v332
        %v469 = vpop.f32.mrb[0].mxu0
        %v470 = vadd.f32 0.0, %v469
        %v471 = vpop.f32.mrb[0].mxu0
        %472 = vmatprep.mubr.f32.mxu0 0.0
        %473 = vmatmul.mubr.f32.gmra.mrb[0].mxu0 %v335
        %v474 = vpop.f32.mrb[0].mxu0
        %v475 = vadd.f32 0.0, %v474
        %v476 = vpop.f32.mrb[0].mxu0
        %477 = vmatprep.mubr.f32.mxu0 0.0
        %478 = vmatmul.mubr.f32.gmra.mrb[0].mxu0 %v338
        %v479 = vpop.f32.mrb[0].mxu0
        %v480 = vadd.f32 0.0, %v479
        %v481 = vpop.f32.mrb[0].mxu0
        %482 = vmatprep.mubr.f32.mxu0 0.0
        %483 = vmatmul.mubr.f32.gmra.mrb[0].mxu0 %v341
        %v484 = vpop.f32.mrb[0].mxu0
        %v485 = vadd.f32 0.0, %v484
        %v486 = vpop.f32.mrb[0].mxu0
        %487 = vdwg.mxu0
        %489 = vbcast.lane.b32.xlu0 %v250, 256
        %v490 = vpop.permute.xlu0 %489
        %s492 = sor.u32 256, 8
        %493 = vbcast.lane.b32.xlu0 %v250, %s492
        %v494 = vpop.permute.xlu0 %493
        %s496 = sor.u32 256, 16
        %497 = vbcast.lane.b32.xlu0 %v250, %s496
        %v498 = vpop.permute.xlu0 %497
        %s500 = sor.u32 256, 24
        %501 = vbcast.lane.b32.xlu0 %v250, %s500
        %v502 = vpop.permute.xlu0 %501
        %s504 = sor.u32 256, 32
        %505 = vbcast.lane.b32.xlu0 %v250, %s504
        %v506 = vpop.permute.xlu0 %505
        %s508 = sor.u32 256, 40
        %509 = vbcast.lane.b32.xlu0 %v250, %s508
        %v510 = vpop.permute.xlu0 %509
        %s512 = sor.u32 256, 48
        %513 = vbcast.lane.b32.xlu0 %v250, %s512
        %v514 = vpop.permute.xlu0 %513
        %s516 = sor.u32 256, 56
        %517 = vbcast.lane.b32.xlu0 %v250, %s516
        %v518 = vpop.permute.xlu0 %517
        %s520 = sor.u32 256, 64
        %521 = vbcast.lane.b32.xlu0 %v250, %s520
        %v522 = vpop.permute.xlu0 %521
        %s524 = sor.u32 256, 72
        %525 = vbcast.lane.b32.xlu0 %v250, %s524
        %v526 = vpop.permute.xlu0 %525
        %s528 = sor.u32 256, 80
        %529 = vbcast.lane.b32.xlu0 %v250, %s528
        %v530 = vpop.permute.xlu0 %529
        %s532 = sor.u32 256, 88
        %533 = vbcast.lane.b32.xlu0 %v250, %s532
        %v534 = vpop.permute.xlu0 %533
        %s536 = sor.u32 256, 96
        %537 = vbcast.lane.b32.xlu0 %v250, %s536
        %v538 = vpop.permute.xlu0 %537
        %s540 = sor.u32 256, 104
        %541 = vbcast.lane.b32.xlu0 %v250, %s540
        %v542 = vpop.permute.xlu0 %541
        %s544 = sor.u32 256, 112
        %545 = vbcast.lane.b32.xlu0 %v250, %s544
        %v546 = vpop.permute.xlu0 %545
        %s548 = sor.u32 256, 120
        %549 = vbcast.lane.b32.xlu0 %v250, %s548
        %v550 = vpop.permute.xlu0 %549
        %v551 = vadd.f32 %v490, %v259
        %v552 = vadd.f32 %v494, %v259
        %v553 = vadd.f32 %v498, %v259
        %v554 = vadd.f32 %v502, %v259
        %v555 = vadd.f32 %v506, %v259
        %v556 = vadd.f32 %v510, %v259
        %v557 = vadd.f32 %v514, %v259
        %v558 = vadd.f32 %v518, %v259
        %v559 = vadd.f32 %v522, %v259
        %v560 = vadd.f32 %v526, %v259
        %v561 = vadd.f32 %v530, %v259
        %v562 = vadd.f32 %v534, %v259
        %v563 = vadd.f32 %v538, %v259
        %v564 = vadd.f32 %v542, %v259
        %v565 = vadd.f32 %v546, %v259
        %v566 = vadd.f32 %v550, %v259
        %v567 = vadd.f32 %v551, %v410
        %v568 = vadd.f32 %v552, %v415
        %v569 = vadd.f32 %v553, %v420
        %v570 = vadd.f32 %v554, %v425
        %v571 = vadd.f32 %v555, %v430
        %v572 = vadd.f32 %v556, %v435
        %v573 = vadd.f32 %v557, %v440
        %v574 = vadd.f32 %v558, %v445
        %v575 = vadd.f32 %v559, %v450
        %v576 = vadd.f32 %v560, %v455
        %v577 = vadd.f32 %v561, %v460
        %v578 = vadd.f32 %v562, %v465
        %v579 = vadd.f32 %v563, %v470
        %v580 = vadd.f32 %v564, %v475
        %v581 = vadd.f32 %v565, %v480
        %v582 = vadd.f32 %v566, %v485
        %v583 = vmin.f32 %v567, %v571
        %v584 = vmin.f32 %v568, %v572
        %v585 = vmin.f32 %v569, %v573
        %v586 = vmin.f32 %v570, %v574
        %v587 = vmin.f32 %v583, %v575
        %v588 = vmin.f32 %v584, %v576
        %v589 = vmin.f32 %v585, %v577
        %v590 = vmin.f32 %v586, %v578
        %v591 = vmin.f32 %v587, %v579
        %v592 = vmin.f32 %v588, %v580
        %v593 = vmin.f32 %v589, %v581
        %v594 = vmin.f32 %v590, %v582
        %v595 = vmin.f32 %v591, %v592
        %v596 = vmin.f32 %v593, %v594
        %v597 = vmin.f32 %v595, %v596
        %v598 = vrot.slane %v597, 4
        %v599 = vmin.f32 %v597, %v598
        %v600 = vrot.slane %v599, 2
        %v601 = vmin.f32 %v599, %v600
        %v602 = vrot.slane %v601, 1
        %v603 = vmin.f32 %v601, %v602
        %604 = vst [vmem:[%s231] sm:$0x1] %v603
        %605 = vmin.xlane.f32.xlu0 %v567
        %v606 = vpop.xlane.xlu0 %605
        %607 = vmin.xlane.f32.xlu0 %v568
        %v608 = vpop.xlane.xlu0 %607
        %609 = vmin.xlane.f32.xlu0 %v569
        %v610 = vpop.xlane.xlu0 %609
        %611 = vmin.xlane.f32.xlu0 %v570
        %v612 = vpop.xlane.xlu0 %611
        %613 = vmin.xlane.f32.xlu0 %v571
        %v614 = vpop.xlane.xlu0 %613
        %615 = vmin.xlane.f32.xlu0 %v572
        %v616 = vpop.xlane.xlu0 %615
        %617 = vmin.xlane.f32.xlu0 %v573
        %v618 = vpop.xlane.xlu0 %617
        %619 = vmin.xlane.f32.xlu0 %v574
        %v620 = vpop.xlane.xlu0 %619
        %621 = vmin.xlane.f32.xlu0 %v575
        %v622 = vpop.xlane.xlu0 %621
        %623 = vmin.xlane.f32.xlu0 %v576
        %v624 = vpop.xlane.xlu0 %623
        %625 = vmin.xlane.f32.xlu0 %v577
        %v626 = vpop.xlane.xlu0 %625
        %627 = vmin.xlane.f32.xlu0 %v578
        %v628 = vpop.xlane.xlu0 %627
        %629 = vmin.xlane.f32.xlu0 %v579
        %v630 = vpop.xlane.xlu0 %629
        %631 = vmin.xlane.f32.xlu0 %v580
        %v632 = vpop.xlane.xlu0 %631
        %633 = vmin.xlane.f32.xlu0 %v581
        %v634 = vpop.xlane.xlu0 %633
        %635 = vmin.xlane.f32.xlu0 %v582
        %v636 = vpop.xlane.xlu0 %635
        %v653 = vlaneseq
        %v654 = vand.u32 %v653, 127
        %v655 = vlaneseq
        %v656 = vshrl.u32 %v655, 7
        %v657 = vsub.s32 %v654, %v656
        %v658 = vrot.slane %v606, %v657
        %v659 = vadd.s32 %v654, 4294967288
        %v660 = vlaneseq
        %v661 = vshrl.u32 %v660, 7
        %v662 = vsub.s32 %v659, %v661
        %v663 = vrot.slane %v608, %v662
        %vm664 = vcmask 130112
        %v665 = vsel %vm664, %v663, %v658
        %v666 = vadd.s32 %v654, 4294967280
        %v667 = vlaneseq
        %v668 = vshrl.u32 %v667, 7
        %v669 = vsub.s32 %v666, %v668
        %v670 = vrot.slane %v610, %v669
        %vm671 = vcmask 195712
        %v672 = vsel %vm671, %v670, %v665
        %v673 = vadd.s32 %v654, 4294967272
        %v674 = vlaneseq
        %v675 = vshrl.u32 %v674, 7
        %v676 = vsub.s32 %v673, %v675
        %v677 = vrot.slane %v612, %v676
        %vm678 = vcmask 261312
        %v679 = vsel %vm678, %v677, %v672
        %v680 = vadd.s32 %v654, 4294967264
        %v681 = vlaneseq
        %v682 = vshrl.u32 %v681, 7
        %v683 = vsub.s32 %v680, %v682
        %v684 = vrot.slane %v614, %v683
        %vm685 = vcmask 326912
        %v686 = vsel %vm685, %v684, %v679
        %v687 = vadd.s32 %v654, 4294967256
        %v688 = vlaneseq
        %v689 = vshrl.u32 %v688, 7
        %v690 = vsub.s32 %v687, %v689
        %v691 = vrot.slane %v616, %v690
        %vm692 = vcmask 392512
        %v693 = vsel %vm692, %v691, %v686
        %v694 = vadd.s32 %v654, 4294967248
        %v695 = vlaneseq
        %v696 = vshrl.u32 %v695, 7
        %v697 = vsub.s32 %v694, %v696
        %v698 = vrot.slane %v618, %v697
        %vm699 = vcmask 458112
        %v700 = vsel %vm699, %v698, %v693
        %v701 = vadd.s32 %v654, 4294967240
        %v702 = vlaneseq
        %v703 = vshrl.u32 %v702, 7
        %v704 = vsub.s32 %v701, %v703
        %v705 = vrot.slane %v620, %v704
        %vm706 = vcmask 523712
        %v707 = vsel %vm706, %v705, %v700
        %v708 = vadd.s32 %v654, 4294967232
        %v709 = vlaneseq
        %v710 = vshrl.u32 %v709, 7
        %v711 = vsub.s32 %v708, %v710
        %v712 = vrot.slane %v622, %v711
        %vm713 = vcmask 589312
        %v714 = vsel %vm713, %v712, %v707
        %v715 = vadd.s32 %v654, 4294967224
        %v716 = vlaneseq
        %v717 = vshrl.u32 %v716, 7
        %v718 = vsub.s32 %v715, %v717
        %v719 = vrot.slane %v624, %v718
        %vm720 = vcmask 654912
        %v721 = vsel %vm720, %v719, %v714
        %v722 = vadd.s32 %v654, 4294967216
        %v723 = vlaneseq
        %v724 = vshrl.u32 %v723, 7
        %v725 = vsub.s32 %v722, %v724
        %v726 = vrot.slane %v626, %v725
        %vm727 = vcmask 720512
        %v728 = vsel %vm727, %v726, %v721
        %v729 = vadd.s32 %v654, 4294967208
        %v730 = vlaneseq
        %v731 = vshrl.u32 %v730, 7
        %v732 = vsub.s32 %v729, %v731
        %v733 = vrot.slane %v628, %v732
        %vm734 = vcmask 786112
        %v735 = vsel %vm734, %v733, %v728
        %v736 = vadd.s32 %v654, 4294967200
        %v737 = vlaneseq
        %v738 = vshrl.u32 %v737, 7
        %v739 = vsub.s32 %v736, %v738
        %v740 = vrot.slane %v630, %v739
        %vm741 = vcmask 851712
        %v742 = vsel %vm741, %v740, %v735
        %v743 = vadd.s32 %v654, 4294967192
        %v744 = vlaneseq
        %v745 = vshrl.u32 %v744, 7
        %v746 = vsub.s32 %v743, %v745
        %v747 = vrot.slane %v632, %v746
        %vm748 = vcmask 917312
        %v749 = vsel %vm748, %v747, %v742
        %v750 = vadd.s32 %v654, 4294967184
        %v751 = vlaneseq
        %v752 = vshrl.u32 %v751, 7
        %v753 = vsub.s32 %v750, %v752
        %v754 = vrot.slane %v634, %v753
        %vm755 = vcmask 982912
        %v756 = vsel %vm755, %v754, %v749
        %v757 = vadd.s32 %v654, 4294967176
        %v758 = vlaneseq
        %v759 = vshrl.u32 %v758, 7
        %v760 = vsub.s32 %v757, %v759
        %v761 = vrot.slane %v636, %v760
        %vm762 = vcmask 1048512
        %v763 = vsel %vm762, %v761, %v756
        %765 = vst [vmem:[%s237] sm:$0x1] %v763
        %s766 = sand.u32 %s87, 1
        %s767 = scalar_lea.sflag [#allocation4], %s766
        %s768 = sand.u32 %s87, 1
        %s769 = scalar_lea.vmem [#allocation7], %s768
        %s770 = sand.u32 %s113, 1
        %s771 = scalar_lea.sflag [#allocation9], %s770
        %s772 = sand.u32 %s113, 1
        %s773 = scalar_lea.vmem [#allocation8], %s772
        // Predicated region
        $region37: #{tpu_custom_call.1} parent=27 // pred_check
          %p774 = pneg %p97
        $region38: #{tpu_custom_call.1} parent=27 // pred_check_branch
          %776 = sbr.rel (%p774) target = $region40
        $region39: #{tpu_custom_call.1} parent=27 // pred_region
          %s778 = ssub.s32 16, 16
          %779 = vsyncadd %s767, %s778
          %s780 = smul.addr %s27, 16
          %s781 = scalar_lea.hbm %s2, %s780
          %s783 = sshll.u32 %s769, 4
          %s784 = int_to_ptr.vmem [resolvable:$true] %s783
          %786 = dma.vmem_to_hbm [thread:$0]  %s784, 16, %s781, %s767
        $region40: #{tpu_custom_call.1} parent=27 // pred_fallthru
          _
        // Predicated region
        $region41: #{tpu_custom_call.1} parent=27 // pred_check
          %p787 = pneg %p123
        $region42: #{tpu_custom_call.1} parent=27 // pred_check_branch
          %789 = sbr.rel (%p787) target = $region44
        $region43: #{tpu_custom_call.1} parent=27 // pred_region
          %s791 = ssub.s32 16, 16
          %792 = vsyncadd %s771, %s791
          %s793 = smul.addr %s27, 16
          %s794 = scalar_lea.hbm %s3, %s793
          %s796 = sshll.u32 %s773, 4
          %s797 = int_to_ptr.vmem [resolvable:$true] %s796
          %799 = dma.vmem_to_hbm [thread:$0]  %s797, 16, %s794, %s771
        $region44: #{tpu_custom_call.1} parent=27 // pred_fallthru
          _
      $region28: #{tpu_custom_call.1} parent=5 // pred_fallthru
        _
      %p800 = scmp.le.s32.totalorder 2, %s22
      // Predicated region
      $region45: #{tpu_custom_call.1} parent=5 // pred_check
        %p801 = pneg %p800
      $region46: #{tpu_custom_call.1} parent=5 // pred_check_branch
        %803 = sbr.rel (%p801) target = $region48
      $region47: #{tpu_custom_call.1} parent=5 // pred_region
        %s804 = ssub.s32 %s22, 2
        // Predicated region
        $region49: #{tpu_custom_call.1} parent=47 // pred_check
          %p805 = pneg %p103
        $region50: #{tpu_custom_call.1} parent=47 // pred_check_branch
          %807 = sbr.rel (%p805) target = $region52
        $region51: #{tpu_custom_call.1} parent=47 // pred_region
          %s808 = sand.u32 %s88, 1
          %s809 = scalar_lea.sflag [#allocation4], %s808
          %s810 = sand.u32 %s88, 1
          %s811 = scalar_lea.vmem [#allocation7], %s810
          %812 = dma.done %s809, 16
        $region52: #{tpu_custom_call.1} parent=47 // pred_fallthru
          _
        // Predicated region
        $region53: #{tpu_custom_call.1} parent=47 // pred_check
          %p813 = pneg %p129
        $region54: #{tpu_custom_call.1} parent=47 // pred_check_branch
          %815 = sbr.rel (%p813) target = $region56
        $region55: #{tpu_custom_call.1} parent=47 // pred_region
          %s816 = sand.u32 %s114, 1
          %s817 = scalar_lea.sflag [#allocation9], %s816
          %s818 = sand.u32 %s114, 1
          %s819 = scalar_lea.vmem [#allocation8], %s818
          %820 = dma.done %s817, 16
        $region56: #{tpu_custom_call.1} parent=47 // pred_fallthru
          _
      $region48: #{tpu_custom_call.1} parent=5 // pred_fallthru
        _
    $region6: #{tpu_custom_call.1} parent=1 // loop_footer
      %s26 = sadd.s32 1, %s22
    $region7: #{tpu_custom_call.1} parent=1 // loop_footer_branch
      %21 = sbr.rel target = $region3
    $region8: #{tpu_custom_call.1} parent=1 // loop_exit
      _
    %821 = vsyncpa [#allocation3], 1
    %s822 = scalar_lea.sflag [#allocation3], 1
    %823 = vsyncpa %s822, 1
    %824 = vsyncpa [#allocation6], 1
    %s825 = scalar_lea.sflag [#allocation6], 1
    %826 = vsyncpa %s825, 1
    %827 = vsyncpa [#allocation4], 1
    %s828 = scalar_lea.sflag [#allocation4], 1
    %829 = vsyncpa %s828, 1
    %830 = vsyncpa [#allocation9], 1
    %s831 = scalar_lea.sflag [#allocation9], 1
    %832 = vsyncpa %s831, 1

</llo_original>
